<compile_context>
chip_gen: v5e
topology: v5e:2x2
jax: 0.10.0
libtpu: 0.0.40
codegen_flags: <defaults>
</compile_context>

<pallas_src>
import numpy as np
import jax
import jax.numpy as jnp
from jax import lax
from jax.experimental import pallas as pl
from jax.experimental.pallas import tpu as pltpu


# ----------------------------------------------------------------------------
# Host-side parameter setup: 3-point periodic stencil coefficients (and the
# dense matrix form, kept only for the reference check in __main__).
# ----------------------------------------------------------------------------
def second_diff2_coeffs_periodic(coords: np.ndarray, period: float):
    """Return (a, b, c) float32 stencil vectors for f''; periodic, non-uniform."""
    coords = np.asarray(coords, dtype=np.float64)
    n = coords.shape[0]
    idx = np.arange(n)
    xm = coords[(idx - 1) % n]
    xp = coords[(idx + 1) % n]
    h1 = coords - xm
    h1 = np.where(h1 <= 0.0, h1 + period, h1)   # wrap spacing at i = 0
    h2 = xp - coords
    h2 = np.where(h2 <= 0.0, h2 + period, h2)   # wrap spacing at i = N-1
    a = 2.0 / (h1 * (h1 + h2))                  # coeff for f_{i-1}
    b = -2.0 / (h1 * h2)                        # coeff for f_i
    c = 2.0 / (h2 * (h1 + h2))                  # coeff for f_{i+1}
    return a.astype(np.float32), b.astype(np.float32), c.astype(np.float32)


def second_diff2_matrix_periodic(coords: np.ndarray, period: float) -> np.ndarray:
    """Dense (N,N) 2nd-derivative matrix (reference only)."""
    a, b, c = second_diff2_coeffs_periodic(coords, period)
    n = a.shape[0]
    idx = np.arange(n)
    D = np.zeros((n, n), dtype=np.float64)
    D[idx, (idx - 1) % n] += a
    D[idx, idx] += b
    D[idx, (idx + 1) % n] += c
    return D.astype(np.float32)


# ----------------------------------------------------------------------------
# Pallas kernel: per batch slab,
#   lap = (b_x + b_y)*s + a_x*roll_x(+1) + c_x*roll_x(-1)
#                       + a_y*roll_y(+1) + c_y*roll_y(-1)
# ----------------------------------------------------------------------------
def _laplace_stencil_kernel(ax_ref, bx_ref, cx_ref, ay_ref, by_ref, cy_ref,
                            s_ref, o_ref):
    TB, NX, NY = s_ref.shape
    ax = ax_ref[...]                      # (NX, 1)
    cx = cx_ref[...]                      # (NX, 1)
    ay = ay_ref[...]                      # (1, NY)
    cy = cy_ref[...]                      # (1, NY)
    c0 = bx_ref[...] + by_ref[...]        # (NX, NY) combined center coefficient

    def body(b, carry):
        # f32 math, final cast at the store (bf16-safe; kernel is HBM-bound).
        s = s_ref[b].astype(jnp.float32)                       # (NX, NY)
        # Serial accumulation bounds live temporaries to ~one rolled copy.
        # roll(s, +1)[i] = s[i-1] (periodic); roll(s, N-1)[i] = s[i+1].
        acc = c0 * s
        acc = acc + ax * pltpu.roll(s, shift=1, axis=0)
        acc = acc + cx * pltpu.roll(s, shift=NX - 1, axis=0)
        acc = acc + ay * pltpu.roll(s, shift=1, axis=1)
        acc = acc + cy * pltpu.roll(s, shift=NY - 1, axis=1)
        o_ref[b] = acc.astype(o_ref.dtype)
        return carry

    lax.fori_loop(0, TB, body, 0, unroll=min(TB, 8))


# ----------------------------------------------------------------------------
# Wrapper: VMEM-budget-driven batch tiling + explicit vmem_limit_bytes.
# ----------------------------------------------------------------------------
def _physical_vmem_bytes() -> int:
    """Best-effort physical VMEM query; conservative 64 MiB fallback (v7x)."""
    try:
        info = pltpu.get_tpu_info()
        for attr in ("vmem_capacity_bytes", "vmem_size_bytes", "vmem_bytes"):
            v = getattr(info, attr, None)
            if v:
                return int(v)
    except Exception:
        pass
    return 64 << 20


def _pick_batch_tile(B: int, NX: int, NY: int, itemsize: int,
                     target_block_bytes: int, min_steps: int = 2,
                     prefer_even_grid: bool = False) -> int:
    """Largest divisor of B whose (TB, NX, NY) block fits the byte budget,
    keeping >= min_steps grid steps when B allows (DMA/compute overlap and
    megacore sharding of the 'parallel' batch axis)."""
    slab = max(1, NX * NY * itemsize)
    cap = max(1, min(B, target_block_bytes // slab))
    if B >= min_steps:
        cap = min(cap, B // min_steps)
    cap = max(1, int(cap))
    divisors = [tb for tb in range(1, cap + 1) if B % tb == 0]
    if prefer_even_grid:
        even = [tb for tb in divisors if (B // tb) % 2 == 0]
        if even:
            return max(even)
    return max(divisors)


def get_laplace_forward(state: jax.Array,
                        ax, bx, cx, ay, by, cy) -> jax.Array:
    """state: (B, NX, NY); coefficient vectors:
       ax/bx/cx: (NX, 1) f32, ay/by/cy: (1, NY) f32.
       Returns diff2_x(state) + diff2_y(state)."""
    B, NX, NY = state.shape
    assert NX >= 3 and NY >= 3, (
        "periodic 3-point stencil needs >= 3 points per axis")

    itemsize = int(jnp.dtype(state.dtype).itemsize)
    phys_vmem = _physical_vmem_bytes()
    small_vmem = phys_vmem <= (64 << 20)          # 64 MiB generation (dual-TC)

    # ~2 MiB blocks on 64 MiB-VMEM parts, ~4 MiB on 128 MiB parts: big enough
    # to amortize the ~0.35 us/step overhead (measured ~85% HBM roofline),
    # small enough that 2x-double-buffered in+out blocks stay cheap.
    target_block_bytes = (2 << 20) if small_vmem else (4 << 20)
    min_steps = 4 if (small_vmem and B >= 4) else 2
    TB = _pick_batch_tile(B, NX, NY, itemsize, target_block_bytes,
                          min_steps=min_steps, prefer_even_grid=small_vmem)
    grid = (B // TB,)

    # Explicit scoped-VMEM limit: 2x double-buffered input + output blocks,
    # f32 in-kernel intermediates (c0, s, one rolled temp, acc + slack),
    # coefficient vectors, plus headroom -- clamped to 3/4 of physical VMEM.
    block_bytes = TB * NX * NY * itemsize
    slab_f32 = NX * NY * 4
    needed = 4 * block_bytes + 6 * slab_f32 + 6 * (NX + NY) * 4 + (4 << 20)
    vmem_limit = int(min(max(needed, 32 << 20), (phys_vmem * 3) // 4))

    coef_spec_x = pl.BlockSpec((NX, 1), lambda i: (0, 0))
    coef_spec_y = pl.BlockSpec((1, NY), lambda i: (0, 0))
    state_spec = pl.BlockSpec((TB, NX, NY), lambda i: (i, 0, 0))

    cost = pl.CostEstimate(
        flops=11 * B * NX * NY,
        transcendentals=0,
        bytes_accessed=2 * B * NX * NY * itemsize + 6 * (NX + NY) * 4,
    )

    return pl.pallas_call(
        _laplace_stencil_kernel,
        out_shape=jax.ShapeDtypeStruct((B, NX, NY), state.dtype),
        grid=grid,
        in_specs=[coef_spec_x, coef_spec_x, coef_spec_x,
                  coef_spec_y, coef_spec_y, coef_spec_y,
                  state_spec],
        out_specs=pl.BlockSpec((TB, NX, NY), lambda i: (i, 0, 0)),
        compiler_params=pltpu.CompilerParams(
            dimension_semantics=("parallel",),
            vmem_limit_bytes=vmem_limit),
        cost_estimate=cost,
    )(ax, bx, cx, ay, by, cy, state)


# TODO(synk): getuv_from_phi / get_laplace_p (1st-derivative operators) are not
# needed for forward() and are not implemented here.


if __name__ == "__main__":
    B, NX, NY = 2, 16, 16

    # Deterministic non-uniform periodic grids on [0, 2*pi).
    key = jax.random.PRNGKey(0)
    kx, ky, ks = jax.random.split(key, 3)
    jitter_x = 0.3 * np.asarray(jax.random.uniform(kx, (NX,)))
    jitter_y = 0.3 * np.asarray(jax.random.uniform(ky, (NY,)))
    period_x = 2.0 * np.pi
    period_y = 2.0 * np.pi
    x_vector = np.sort((np.arange(NX) + jitter_x) * (period_x / NX))
    y_vector = np.sort((np.arange(NY) + jitter_y) * (period_y / NY))

    ax_np, bx_np, cx_np = second_diff2_coeffs_periodic(x_vector, period_x)
    ay_np, by_np, cy_np = second_diff2_coeffs_periodic(y_vector, period_y)

    ax = jnp.asarray(ax_np).reshape(NX, 1)
    bx = jnp.asarray(bx_np).reshape(NX, 1)
    cx = jnp.asarray(cx_np).reshape(NX, 1)
    ay = jnp.asarray(ay_np).reshape(1, NY)
    by = jnp.asarray(by_np).reshape(1, NY)
    cy = jnp.asarray(cy_np).reshape(1, NY)

    # layout: (B, NX, NY)
    state = jax.random.normal(ks, (B, NX, NY), dtype=jnp.float32)

    out = get_laplace_forward(state, ax, bx, cx, ay, by, cy)
    out = jax.block_until_ready(out)

    # Reference (plain JAX, dense-matrix form) check of the same semantics.
    d2x = jnp.asarray(second_diff2_matrix_periodic(x_vector, period_x))
    d2y = jnp.asarray(second_diff2_matrix_periodic(y_vector, period_y))
    ref = (jnp.einsum("ik,bkj->bij", d2x, state)
           + jnp.einsum("bik,jk->bij", state, d2y))

    assert out.shape == (B, NX, NY)
    np.testing.assert_allclose(np.asarray(out), np.asarray(ref),
                               rtol=2e-5, atol=1e-4)
    print("KERNEL_OK")
</pallas_src>

<mosaic_0001>
module attributes {stable_mosaic.version = 11 : i64} {
  func.func @_laplace_stencil_kernel(%arg0: i32, %arg1: memref<16x1xf32, #tpu.memory_space<vmem>>, %arg2: memref<16x1xf32, #tpu.memory_space<vmem>>, %arg3: memref<16x1xf32, #tpu.memory_space<vmem>>, %arg4: memref<1x16xf32, #tpu.memory_space<vmem>>, %arg5: memref<1x16xf32, #tpu.memory_space<vmem>>, %arg6: memref<1x16xf32, #tpu.memory_space<vmem>>, %arg7: memref<1x16x16xf32, #tpu.memory_space<vmem>>, %arg8: memref<1x16x16xf32, #tpu.memory_space<vmem>>) attributes {dimension_semantics = [#tpu.dimension_semantics<parallel>], iteration_bounds = array<i64: 2>, scalar_prefetch = 0 : i64, scratch_operands = 0 : i64, tpu.core_type = #tpu.core_type<tc>, window_params = [{pipeline_mode = #tpu.pipeline_mode<synchronous>, transform_indices = @transform_0, window_bounds = array<i64: 16, 1>}, {pipeline_mode = #tpu.pipeline_mode<synchronous>, transform_indices = @transform_1, window_bounds = array<i64: 16, 1>}, {pipeline_mode = #tpu.pipeline_mode<synchronous>, transform_indices = @transform_2, window_bounds = array<i64: 16, 1>}, {pipeline_mode = #tpu.pipeline_mode<synchronous>, transform_indices = @transform_3, window_bounds = array<i64: 1, 16>}, {pipeline_mode = #tpu.pipeline_mode<synchronous>, transform_indices = @transform_4, window_bounds = array<i64: 1, 16>}, {pipeline_mode = #tpu.pipeline_mode<synchronous>, transform_indices = @transform_5, window_bounds = array<i64: 1, 16>}, {transform_indices = @transform_6, window_bounds = array<i64: 1, 16, 16>}, {transform_indices = @transform_7, window_bounds = array<i64: 1, 16, 16>}]} {
    %c0 = arith.constant 0 : index
    %c0_0 = arith.constant 0 : index
    %0 = vector.load %arg1[%c0, %c0_0] : memref<16x1xf32, #tpu.memory_space<vmem>>, vector<16x1xf32>
    %c0_1 = arith.constant 0 : index
    %c0_2 = arith.constant 0 : index
    %1 = vector.load %arg3[%c0_1, %c0_2] : memref<16x1xf32, #tpu.memory_space<vmem>>, vector<16x1xf32>
    %c0_3 = arith.constant 0 : index
    %c0_4 = arith.constant 0 : index
    %2 = vector.load %arg4[%c0_3, %c0_4] : memref<1x16xf32, #tpu.memory_space<vmem>>, vector<1x16xf32>
    %c0_5 = arith.constant 0 : index
    %c0_6 = arith.constant 0 : index
    %3 = vector.load %arg6[%c0_5, %c0_6] : memref<1x16xf32, #tpu.memory_space<vmem>>, vector<1x16xf32>
    %c0_7 = arith.constant 0 : index
    %c0_8 = arith.constant 0 : index
    %4 = vector.load %arg2[%c0_7, %c0_8] : memref<16x1xf32, #tpu.memory_space<vmem>>, vector<16x1xf32>
    %c0_9 = arith.constant 0 : index
    %c0_10 = arith.constant 0 : index
    %5 = vector.load %arg5[%c0_9, %c0_10] : memref<1x16xf32, #tpu.memory_space<vmem>>, vector<1x16xf32>
    %6 = vector.broadcast %4 : vector<16x1xf32> to vector<16x16xf32>
    %7 = vector.broadcast %5 : vector<1x16xf32> to vector<16x16xf32>
    %8 = arith.addf %6, %7 : vector<16x16xf32>
    %c0_i32 = arith.constant 0 : i32
    %9 = arith.index_cast %c0_i32 : i32 to index
    %c0_11 = arith.constant 0 : index
    %c0_12 = arith.constant 0 : index
    %10 = vector.load %arg7[%9, %c0_11, %c0_12] : memref<1x16x16xf32, #tpu.memory_space<vmem>>, vector<1x16x16xf32>
    %11 = vector.shape_cast %10 : vector<1x16x16xf32> to vector<16x16xf32>
    %12 = arith.mulf %8, %11 : vector<16x16xf32>
    %c1_i32 = arith.constant 1 : i32
    %13 = tpu.dynamic_rotate %11 by %c1_i32 dim 0 : vector<16x16xf32>, i32 -> vector<16x16xf32>
    %14 = vector.broadcast %0 : vector<16x1xf32> to vector<16x16xf32>
    %15 = arith.mulf %14, %13 : vector<16x16xf32>
    %16 = arith.addf %12, %15 : vector<16x16xf32>
    %c15_i32 = arith.constant 15 : i32
    %17 = tpu.dynamic_rotate %11 by %c15_i32 dim 0 : vector<16x16xf32>, i32 -> vector<16x16xf32>
    %18 = vector.broadcast %1 : vector<16x1xf32> to vector<16x16xf32>
    %19 = arith.mulf %18, %17 : vector<16x16xf32>
    %20 = arith.addf %16, %19 : vector<16x16xf32>
    %c1_i32_13 = arith.constant 1 : i32
    %21 = tpu.dynamic_rotate %11 by %c1_i32_13 dim 1 : vector<16x16xf32>, i32 -> vector<16x16xf32>
    %22 = vector.broadcast %2 : vector<1x16xf32> to vector<16x16xf32>
    %23 = arith.mulf %22, %21 : vector<16x16xf32>
    %24 = arith.addf %20, %23 : vector<16x16xf32>
    %c15_i32_14 = arith.constant 15 : i32
    %25 = tpu.dynamic_rotate %11 by %c15_i32_14 dim 1 : vector<16x16xf32>, i32 -> vector<16x16xf32>
    %26 = vector.broadcast %3 : vector<1x16xf32> to vector<16x16xf32>
    %27 = arith.mulf %26, %25 : vector<16x16xf32>
    %28 = arith.addf %24, %27 : vector<16x16xf32>
    %29 = arith.index_cast %c0_i32 : i32 to index
    %c0_15 = arith.constant 0 : index
    %c0_16 = arith.constant 0 : index
    %30 = vector.load %arg8[%29, %c0_15, %c0_16] : memref<1x16x16xf32, #tpu.memory_space<vmem>>, vector<1x16x16xf32>
    %31 = vector.shape_cast %30 : vector<1x16x16xf32> to vector<16x16xf32>
    %32 = vector.shape_cast %28 : vector<16x16xf32> to vector<1x16x16xf32>
    tpu.vector_store %arg8[%29, %c0_15, %c0_16], %32 {strides = array<i32>} : memref<1x16x16xf32, #tpu.memory_space<vmem>>, vector<1x16x16xf32>,
    %c1_i32_17 = arith.constant 1 : i32
    return
  }
  func.func @transform_0(%arg0: i32) -> (i32, i32) {
    %c0_i32 = arith.constant 0 : i32
    %c0_i32_0 = arith.constant 0 : i32
    %c0_i32_1 = arith.constant 0 : i32
    return %c0_i32, %c0_i32_0 : i32, i32
  }
  func.func @transform_1(%arg0: i32) -> (i32, i32) {
    %c0_i32 = arith.constant 0 : i32
    %c0_i32_0 = arith.constant 0 : i32
    %c0_i32_1 = arith.constant 0 : i32
    return %c0_i32, %c0_i32_0 : i32, i32
  }
  func.func @transform_2(%arg0: i32) -> (i32, i32) {
    %c0_i32 = arith.constant 0 : i32
    %c0_i32_0 = arith.constant 0 : i32
    %c0_i32_1 = arith.constant 0 : i32
    return %c0_i32, %c0_i32_0 : i32, i32
  }
  func.func @transform_3(%arg0: i32) -> (i32, i32) {
    %c0_i32 = arith.constant 0 : i32
    %c0_i32_0 = arith.constant 0 : i32
    %c0_i32_1 = arith.constant 0 : i32
    return %c0_i32, %c0_i32_0 : i32, i32
  }
  func.func @transform_4(%arg0: i32) -> (i32, i32) {
    %c0_i32 = arith.constant 0 : i32
    %c0_i32_0 = arith.constant 0 : i32
    %c0_i32_1 = arith.constant 0 : i32
    return %c0_i32, %c0_i32_0 : i32, i32
  }
  func.func @transform_5(%arg0: i32) -> (i32, i32) {
    %c0_i32 = arith.constant 0 : i32
    %c0_i32_0 = arith.constant 0 : i32
    %c0_i32_1 = arith.constant 0 : i32
    return %c0_i32, %c0_i32_0 : i32, i32
  }
  func.func @transform_6(%arg0: i32) -> (i32, i32, i32) {
    %c0_i32 = arith.constant 0 : i32
    %c0_i32_0 = arith.constant 0 : i32
    %c0_i32_1 = arith.constant 0 : i32
    return %arg0, %c0_i32, %c0_i32_0 : i32, i32, i32
  }
  func.func @transform_7(%arg0: i32) -> (i32, i32, i32) {
    %c0_i32 = arith.constant 0 : i32
    %c0_i32_0 = arith.constant 0 : i32
    %c0_i32_1 = arith.constant 0 : i32
    return %arg0, %c0_i32, %c0_i32_0 : i32, i32, i32
  }
}

</mosaic_0001>

<llo_original>
// kernel: tpu_custom_call.1
$region0: #{tpu_custom_call.1}
  #allocation0 [shape = 'u32[]', space=smem, size = 0x4, offset = 0x4, fixed_abs, tag = 'smem constant byte address 0x4 - core index']
  #allocation1 [shape = 'u32[72,128]{1,0:T(1,128)}', space=vmem, size = 0x9000, scoped, tag = 'internal scratch']
  %s0 = inlined_call_operand.vmem [shape: f32[16,1], index: 0, kind: input, shape index: {}]
  %s1 = inlined_call_operand.vmem [shape: f32[16,1], index: 1, kind: input, shape index: {}]
  %s2 = inlined_call_operand.vmem [shape: f32[16,1], index: 2, kind: input, shape index: {}]
  %s3 = inlined_call_operand.vmem [shape: f32[1,16], index: 3, kind: input, shape index: {}]
  %s4 = inlined_call_operand.vmem [shape: f32[1,16], index: 4, kind: input, shape index: {}]
  %s5 = inlined_call_operand.vmem [shape: f32[1,16], index: 5, kind: input, shape index: {}]
  %s6 = inlined_call_operand.vmem [shape: f32[2,16,16], index: 6, kind: input, shape index: {}]
  %s7 = inlined_call_operand.hbm [shape: f32[2,16,16], index: 7, kind: output, shape index: {}]
  %s8 = sld [smem:[#allocation0]]
  $region61: #{tpu_custom_call.1} parent=0
    _
  %s10 = ssub.s32 1, %s8
  %s11 = scalar_select 0, %s10, %s8
  $region1: #{tpu_custom_call.1} parent=0
    #allocation2 [shape = 'u8[16384]{0}', space=vmem, size = 0x4000, scoped, tag = 'output window, operand 0']
    #allocation3 [shape = 's32[2]{0}', space=sflag, size = 0x8, scoped, tag = 'scoped memory for tpu_custom_call.1']
    %12 = vsyncpa [#allocation3], 0
    %s13 = scalar_lea.sflag [#allocation3], 1
    %14 = vsyncpa %s13, 0
    loop: start=0, step=1, limit=4
    $region2: #{tpu_custom_call.1} parent=1 // loop_pre_header
      _
    $region3: #{tpu_custom_call.1} parent=1 // loop_header
      %s16 = sphi 0, %s20
      %p17 = scmp.ge.s32.totalorder %s16, 4
      %s24 = sphi 0, %s24
      %s26 = sphi 0, %s24
      %s27 = sphi 0, %s26
      %s41 = sphi 0, %s27
      %s45 = sphi 0, %s45
      %s47 = sphi 0, %s45
      %s48 = sphi 0, %s47
      %s62 = sphi 0, %s48
      %s66 = sphi 0, %s66
      %s68 = sphi 0, %s66
      %s69 = sphi 0, %s68
      %s83 = sphi 0, %s69
      %s87 = sphi 0, %s87
      %s89 = sphi 0, %s87
      %s90 = sphi 0, %s89
      %s104 = sphi 0, %s90
      %s108 = sphi 0, %s108
      %s110 = sphi 0, %s108
      %s111 = sphi 0, %s110
      %s125 = sphi 0, %s111
      %s129 = sphi 0, %s129
      %s131 = sphi 0, %s129
      %s132 = sphi 0, %s131
      %s146 = sphi 0, %s132
      %s152 = sphi 0, %s154
      %s155 = sphi 0, %s152
      %s156 = sphi 0, %s155
      %s172 = sphi 0, %s156
      %s178 = sphi 0, %s180
      %s181 = sphi 0, %s178
      %s182 = sphi 0, %s181
      %s198 = sphi 0, %s182
    $region4: #{tpu_custom_call.1} parent=1 // loop_header_branch
      %19 = sbr.rel (%p17) target = $region8
    $region5: #{tpu_custom_call.1} parent=1 // loop_body
      %s21 = ssub.s32 %s16, 1
      %s22 = ssub.s32 %s16, 2
      %s23 = sadd.s32 %s16, 1
      %s25 = sadd.s32 %s24, 1
      %p28 = scmp.eq.s32.totalorder %s16, 1
      %p29 = scmp.ne.s32.totalorder %s24, %s26
      %p30 = scmp.eq.s32.totalorder %s16, 0
      %p31 = por %p29, %p30
      %p32 = scmp.ne.s32.totalorder %s24, %s26
      %p33 = scmp.eq.s32.totalorder %s21, 1
      %p34 = por %p32, %p33
      %p35 = scmp.ne.s32.totalorder %s26, %s27
      %p36 = scmp.eq.s32.totalorder %s21, 0
      %p37 = por %p35, %p36
      %p38 = scmp.ne.s32.totalorder %s26, %s27
      %p39 = scmp.eq.s32.totalorder %s22, 1
      %p40 = por %p38, %p39
      %p42 = scmp.ne.s32.totalorder %s27, %s41
      %p43 = scmp.eq.s32.totalorder %s22, 0
      %p44 = por %p42, %p43
      %s46 = sadd.s32 %s45, 1
      %p49 = scmp.eq.s32.totalorder %s16, 1
      %p50 = scmp.ne.s32.totalorder %s45, %s47
      %p51 = scmp.eq.s32.totalorder %s16, 0
      %p52 = por %p50, %p51
      %p53 = scmp.ne.s32.totalorder %s45, %s47
      %p54 = scmp.eq.s32.totalorder %s21, 1
      %p55 = por %p53, %p54
      %p56 = scmp.ne.s32.totalorder %s47, %s48
      %p57 = scmp.eq.s32.totalorder %s21, 0
      %p58 = por %p56, %p57
      %p59 = scmp.ne.s32.totalorder %s47, %s48
      %p60 = scmp.eq.s32.totalorder %s22, 1
      %p61 = por %p59, %p60
      %p63 = scmp.ne.s32.totalorder %s48, %s62
      %p64 = scmp.eq.s32.totalorder %s22, 0
      %p65 = por %p63, %p64
      %s67 = sadd.s32 %s66, 1
      %p70 = scmp.eq.s32.totalorder %s16, 1
      %p71 = scmp.ne.s32.totalorder %s66, %s68
      %p72 = scmp.eq.s32.totalorder %s16, 0
      %p73 = por %p71, %p72
      %p74 = scmp.ne.s32.totalorder %s66, %s68
      %p75 = scmp.eq.s32.totalorder %s21, 1
      %p76 = por %p74, %p75
      %p77 = scmp.ne.s32.totalorder %s68, %s69
      %p78 = scmp.eq.s32.totalorder %s21, 0
      %p79 = por %p77, %p78
      %p80 = scmp.ne.s32.totalorder %s68, %s69
      %p81 = scmp.eq.s32.totalorder %s22, 1
      %p82 = por %p80, %p81
      %p84 = scmp.ne.s32.totalorder %s69, %s83
      %p85 = scmp.eq.s32.totalorder %s22, 0
      %p86 = por %p84, %p85
      %s88 = sadd.s32 %s87, 1
      %p91 = scmp.eq.s32.totalorder %s16, 1
      %p92 = scmp.ne.s32.totalorder %s87, %s89
      %p93 = scmp.eq.s32.totalorder %s16, 0
      %p94 = por %p92, %p93
      %p95 = scmp.ne.s32.totalorder %s87, %s89
      %p96 = scmp.eq.s32.totalorder %s21, 1
      %p97 = por %p95, %p96
      %p98 = scmp.ne.s32.totalorder %s89, %s90
      %p99 = scmp.eq.s32.totalorder %s21, 0
      %p100 = por %p98, %p99
      %p101 = scmp.ne.s32.totalorder %s89, %s90
      %p102 = scmp.eq.s32.totalorder %s22, 1
      %p103 = por %p101, %p102
      %p105 = scmp.ne.s32.totalorder %s90, %s104
      %p106 = scmp.eq.s32.totalorder %s22, 0
      %p107 = por %p105, %p106
      %s109 = sadd.s32 %s108, 1
      %p112 = scmp.eq.s32.totalorder %s16, 1
      %p113 = scmp.ne.s32.totalorder %s108, %s110
      %p114 = scmp.eq.s32.totalorder %s16, 0
      %p115 = por %p113, %p114
      %p116 = scmp.ne.s32.totalorder %s108, %s110
      %p117 = scmp.eq.s32.totalorder %s21, 1
      %p118 = por %p116, %p117
      %p119 = scmp.ne.s32.totalorder %s110, %s111
      %p120 = scmp.eq.s32.totalorder %s21, 0
      %p121 = por %p119, %p120
      %p122 = scmp.ne.s32.totalorder %s110, %s111
      %p123 = scmp.eq.s32.totalorder %s22, 1
      %p124 = por %p122, %p123
      %p126 = scmp.ne.s32.totalorder %s111, %s125
      %p127 = scmp.eq.s32.totalorder %s22, 0
      %p128 = por %p126, %p127
      %s130 = sadd.s32 %s129, 1
      %p133 = scmp.eq.s32.totalorder %s16, 1
      %p134 = scmp.ne.s32.totalorder %s129, %s131
      %p135 = scmp.eq.s32.totalorder %s16, 0
      %p136 = por %p134, %p135
      %p137 = scmp.ne.s32.totalorder %s129, %s131
      %p138 = scmp.eq.s32.totalorder %s21, 1
      %p139 = por %p137, %p138
      %p140 = scmp.ne.s32.totalorder %s131, %s132
      %p141 = scmp.eq.s32.totalorder %s21, 0
      %p142 = por %p140, %p141
      %p143 = scmp.ne.s32.totalorder %s131, %s132
      %p144 = scmp.eq.s32.totalorder %s22, 1
      %p145 = por %p143, %p144
      %p147 = scmp.ne.s32.totalorder %s132, %s146
      %p148 = scmp.eq.s32.totalorder %s22, 0
      %p149 = por %p147, %p148
      %s150 = ssub.s32 %s16, %s23
      %p151 = scmp.eq.s32.totalorder %s150, 0
      %s153 = sadd.s32 %s152, 1
      %s154 = scalar_select %p151, %s152, %s153
      %p157 = pneg %p151
      %p158 = scmp.eq.s32.totalorder %s16, 1
      %p159 = por %p157, %p158
      %p160 = scmp.ne.s32.totalorder %s152, %s155
      %p161 = scmp.eq.s32.totalorder %s16, 0
      %p162 = por %p160, %p161
      %p163 = scmp.ne.s32.totalorder %s152, %s155
      %p164 = scmp.eq.s32.totalorder %s21, 1
      %p165 = por %p163, %p164
      %p166 = scmp.ne.s32.totalorder %s155, %s156
      %p167 = scmp.eq.s32.totalorder %s21, 0
      %p168 = por %p166, %p167
      %p169 = scmp.ne.s32.totalorder %s155, %s156
      %p170 = scmp.eq.s32.totalorder %s22, 1
      %p171 = por %p169, %p170
      %p173 = scmp.ne.s32.totalorder %s156, %s172
      %p174 = scmp.eq.s32.totalorder %s22, 0
      %p175 = por %p173, %p174
      %s176 = ssub.s32 %s16, %s23
      %p177 = scmp.eq.s32.totalorder %s176, 0
      %s179 = sadd.s32 %s178, 1
      %s180 = scalar_select %p177, %s178, %s179
      %p183 = pneg %p177
      %p184 = scmp.eq.s32.totalorder %s16, 1
      %p185 = por %p183, %p184
      %p186 = scmp.ne.s32.totalorder %s178, %s181
      %p187 = scmp.eq.s32.totalorder %s16, 0
      %p188 = por %p186, %p187
      %p189 = scmp.ne.s32.totalorder %s178, %s181
      %p190 = scmp.eq.s32.totalorder %s21, 1
      %p191 = por %p189, %p190
      %p192 = scmp.ne.s32.totalorder %s181, %s182
      %p193 = scmp.eq.s32.totalorder %s21, 0
      %p194 = por %p192, %p193
      %p195 = scmp.ne.s32.totalorder %s181, %s182
      %p196 = scmp.eq.s32.totalorder %s22, 1
      %p197 = por %p195, %p196
      %p199 = scmp.ne.s32.totalorder %s182, %s198
      %p200 = scmp.eq.s32.totalorder %s22, 0
      %p201 = por %p199, %p200
      %p202 = scmp.le.s32.totalorder 1, %s16
      %p203 = scmp.lt.s32.totalorder %s16, 3
      %p204 = pnand %p202, %p203
      %p205 = pneg %p204
      // Predicated region
      $region9: #{tpu_custom_call.1} parent=5 // pred_check
        _
      $region10: #{tpu_custom_call.1} parent=5 // pred_check_branch
        %207 = sbr.rel (%p204) target = $region12
      $region11: #{tpu_custom_call.1} parent=5 // pred_region
        %s208 = ssub.s32 %s16, 1
        // Predicated region
        $region13: #{tpu_custom_call.1} parent=11 // pred_check
          %p209 = pneg %p37
        $region14: #{tpu_custom_call.1} parent=11 // pred_check_branch
          %211 = sbr.rel (%p209) target = $region16
        $region15: #{tpu_custom_call.1} parent=11 // pred_region
          _
        $region16: #{tpu_custom_call.1} parent=11 // pred_fallthru
          _
        // Predicated region
        $region17: #{tpu_custom_call.1} parent=11 // pred_check
          %p212 = pneg %p58
        $region18: #{tpu_custom_call.1} parent=11 // pred_check_branch
          %214 = sbr.rel (%p212) target = $region20
        $region19: #{tpu_custom_call.1} parent=11 // pred_region
          _
        $region20: #{tpu_custom_call.1} parent=11 // pred_fallthru
          _
        // Predicated region
        $region21: #{tpu_custom_call.1} parent=11 // pred_check
          %p215 = pneg %p79
        $region22: #{tpu_custom_call.1} parent=11 // pred_check_branch
          %217 = sbr.rel (%p215) target = $region24
        $region23: #{tpu_custom_call.1} parent=11 // pred_region
          _
        $region24: #{tpu_custom_call.1} parent=11 // pred_fallthru
          _
        // Predicated region
        $region25: #{tpu_custom_call.1} parent=11 // pred_check
          %p218 = pneg %p100
        $region26: #{tpu_custom_call.1} parent=11 // pred_check_branch
          %220 = sbr.rel (%p218) target = $region28
        $region27: #{tpu_custom_call.1} parent=11 // pred_region
          _
        $region28: #{tpu_custom_call.1} parent=11 // pred_fallthru
          _
        // Predicated region
        $region29: #{tpu_custom_call.1} parent=11 // pred_check
          %p221 = pneg %p121
        $region30: #{tpu_custom_call.1} parent=11 // pred_check_branch
          %223 = sbr.rel (%p221) target = $region32
        $region31: #{tpu_custom_call.1} parent=11 // pred_region
          _
        $region32: #{tpu_custom_call.1} parent=11 // pred_fallthru
          _
        // Predicated region
        $region33: #{tpu_custom_call.1} parent=11 // pred_check
          %p224 = pneg %p142
        $region34: #{tpu_custom_call.1} parent=11 // pred_check_branch
          %226 = sbr.rel (%p224) target = $region36
        $region35: #{tpu_custom_call.1} parent=11 // pred_region
          _
        $region36: #{tpu_custom_call.1} parent=11 // pred_fallthru
          _
      $region12: #{tpu_custom_call.1} parent=5 // pred_fallthru
        _
      %p227 = scmp.lt.s32.totalorder %s16, 2
      // Predicated region
      $region37: #{tpu_custom_call.1} parent=5 // pred_check
        %p228 = pneg %p227
      $region38: #{tpu_custom_call.1} parent=5 // pred_check_branch
        %230 = sbr.rel (%p228) target = $region40
      $region39: #{tpu_custom_call.1} parent=5 // pred_region
        // Predicated region
        $region41: #{tpu_custom_call.1} parent=39 // pred_check
          %p231 = pneg %p162
        $region42: #{tpu_custom_call.1} parent=39 // pred_check_branch
          %233 = sbr.rel (%p231) target = $region44
        $region43: #{tpu_custom_call.1} parent=39 // pred_region
          %p234 = scmp.lt.s32.totalorder %s16, 1
          %s235 = scalar_select %p234, %s16, 1
          %s236 = smul.addr %s235, 2
          %s237 = smul.addr %s236, 8
          %s238 = scalar_lea.vmem %s6, %s237
        $region44: #{tpu_custom_call.1} parent=39 // pred_fallthru
          _
      $region40: #{tpu_custom_call.1} parent=5 // pred_fallthru
        _
      %p239 = scmp.le.s32.totalorder 1, %s16
      %p240 = scmp.lt.s32.totalorder %s16, 3
      %p241 = pnand %p239, %p240
      %p242 = pneg %p241
      // Predicated region
      $region45: #{tpu_custom_call.1} parent=5 // pred_check
        _
      $region46: #{tpu_custom_call.1} parent=5 // pred_check_branch
        %244 = sbr.rel (%p241) target = $region48
      $region47: #{tpu_custom_call.1} parent=5 // pred_region
        %s245 = ssub.s32 %s16, 1
        %p246 = pneg %p37
        %p247 = pneg %p34
        %p248 = pneg %p58
        %p249 = pneg %p55
        %p250 = pneg %p79
        %p251 = pneg %p76
        %p252 = pneg %p100
        %p253 = pneg %p97
        %p254 = pneg %p121
        %p255 = pneg %p118
        %p256 = pneg %p142
        %p257 = pneg %p139
        %p258 = scmp.lt.s32.totalorder %s21, 1
        %s259 = scalar_select %p258, %s21, 1
        %s260 = smul.addr %s259, 2
        %s261 = smul.addr %s260, 8
        %s262 = scalar_lea.vmem %s6, %s261
        %p263 = pneg %p168
        %p264 = pneg %p165
        %p265 = pneg %p194
        %p266 = pneg %p191
        %s267 = sand.u32 %s181, 1
        %s268 = scalar_lea.sflag [#allocation3], %s267
        %s269 = sand.u32 %s181, 1
        %s270 = smul.addr %s269, 16
        %s271 = scalar_lea.vmem [#allocation2], %s270
        %p272 = scmp.lt.s32.totalorder %s21, 1
        %s273 = scalar_select %p272, %s21, 1
        %s274 = smul.addr %s273, 2
        %s275 = smul.addr %s274, 8
        %s276 = scalar_lea.vmem %s6, %s275
        %v277 = vld [vmem:[%s0] sm:$0xff]
        %v278 = vld [vmem:[%s0 + $0x8] sm:$0xff]
        %v279 = vld [vmem:[%s2] sm:$0xff]
        %v280 = vld [vmem:[%s2 + $0x8] sm:$0xff]
        %v281 = vld [vmem:[%s3] sm:$0x1]
        %v282 = vld [vmem:[%s5] sm:$0x1]
        %v283 = vld [vmem:[%s1] sm:$0xff]
        %v284 = vld [vmem:[%s1 + $0x8] sm:$0xff]
        %v285 = vld [vmem:[%s4] sm:$0x1]
        %287 = vset.pattern.permute.xlu0 0
        %288 = vperm.xlu0 %287, %v283
        %v289 = vpop.permute.xlu0 %288
        %292 = vset.pattern.permute.xlu0 0
        %293 = vperm.xlu0 %292, %v284
        %v294 = vpop.permute.xlu0 %293
        %v297 = vperm.slane %v285, 0
        %v299 = vadd.f32 %v289, %v297
        %v300 = vadd.f32 %v294, %v297
        %v301 = vld [vmem:[%s276] sm:$0xff]
        %v302 = vld [vmem:[%s276 + $0x8] sm:$0xff]
        %v303 = vmul.f32 %v299, %v301
        %v304 = vmul.f32 %v300, %v302
        %v305 = vrot.slane %v301, 7
        %v306 = vrot.slane %v302, 7
        %v307 = vlaneseq
        %v308 = vshrl.u32 %v307, 7
        %vm309 = vcmp.lt.s32.totalorder %v308, 1
        %v310 = vsel %vm309, %v305, %v306
        %v311 = vsel %vm309, %v306, %v305
        %313 = vset.pattern.permute.xlu0 0
        %314 = vperm.xlu0 %313, %v277
        %v315 = vpop.permute.xlu0 %314
        %318 = vset.pattern.permute.xlu0 0
        %319 = vperm.xlu0 %318, %v278
        %v320 = vpop.permute.xlu0 %319
        %v322 = vmul.f32 %v315, %v311
        %v323 = vmul.f32 %v320, %v310
        %v324 = vadd.f32 %v303, %v322
        %v325 = vadd.f32 %v304, %v323
        %v326 = vrot.slane %v301, 1
        %v327 = vrot.slane %v302, 1
        %vm328 = vcmp.lt.s32.totalorder %v308, 7
        %v329 = vsel %vm328, %v326, %v327
        %v330 = vsel %vm328, %v327, %v326
        %332 = vset.pattern.permute.xlu0 0
        %333 = vperm.xlu0 %332, %v279
        %v334 = vpop.permute.xlu0 %333
        %337 = vset.pattern.permute.xlu0 0
        %338 = vperm.xlu0 %337, %v280
        %v339 = vpop.permute.xlu0 %338
        %v341 = vmul.f32 %v334, %v329
        %v342 = vmul.f32 %v339, %v330
        %v343 = vadd.f32 %v324, %v341
        %v344 = vadd.f32 %v325, %v342
        %vm345 = vcmask 1047680
        %346 = vrot.lane.b32.xlu0 %v301, 16
        %v347 = vpop.permute.xlu0 %346
        %v348 = vsel %vm345, %v347, %v301
        %349 = vrot.lane.b32.xlu0 %v302, 16
        %v350 = vpop.permute.xlu0 %349
        %v351 = vsel %vm345, %v350, %v302
        %352 = vrot.lane.b32.xlu0 %v348, 16
        %v353 = vpop.permute.xlu0 %352
        %354 = vrot.lane.b32.xlu0 %v351, 16
        %v355 = vpop.permute.xlu0 %354
        %v356 = vsel %vm345, %v353, %v301
        %v357 = vsel %vm345, %v355, %v302
        %v359 = vperm.slane %v281, 0
        %363 = vrot.lane.b32.xlu0 %v356, 113
        %v364 = vpop.permute.xlu0 %363
        %365 = vrot.lane.b32.xlu0 %v357, 113
        %v366 = vpop.permute.xlu0 %365
        %v369 = vmul.f32 %v359, %v364
        %v370 = vmul.f32 %v359, %v366
        %v371 = vadd.f32 %v343, %v369
        %v372 = vadd.f32 %v344, %v370
        %v374 = vperm.slane %v282, 0
        %376 = vrot.lane.b32.xlu0 %v356, 127
        %v377 = vpop.permute.xlu0 %376
        %378 = vrot.lane.b32.xlu0 %v357, 127
        %v379 = vpop.permute.xlu0 %378
        %v382 = vmul.f32 %v374, %v377
        %v383 = vmul.f32 %v374, %v379
        %v384 = vadd.f32 %v371, %v382
        %v385 = vadd.f32 %v372, %v383
        %vm386 = vcmask 130048
        %387 = vst.msk [vmem:[%s271] sm:$0xff] %vm386, %v384
        %388 = vst.msk [vmem:[%s271 + $0x8] sm:$0xff] %vm386, %v385
        %s389 = sand.u32 %s181, 1
        %s390 = scalar_lea.sflag [#allocation3], %s389
        %s391 = sand.u32 %s181, 1
        %s392 = smul.addr %s391, 16
        %s393 = scalar_lea.vmem [#allocation2], %s392
        // Predicated region
        $region49: #{tpu_custom_call.1} parent=47 // pred_check
          %p394 = pneg %p191
        $region50: #{tpu_custom_call.1} parent=47 // pred_check_branch
          %396 = sbr.rel (%p394) target = $region52
        $region51: #{tpu_custom_call.1} parent=47 // pred_region
          %398 = vsyncadd %s390, 0
          %s399 = smul.addr %s21, 2
          %s400 = smul.addr %s399, 8
          %s401 = scalar_lea.hbm %s7, %s400
          %s402 = sshll.u32 %s393, 4
          %s403 = int_to_ptr.vmem [resolvable:$true] %s402
          %s404 = sshll.u32 %s401, 4
          %s405 = int_to_ptr.hbm [resolvable:$true] %s404
          %410 = dma.vmem_to_hbm [thread:$0]  %s403, 256, %s405, %s390, 128, 128, 8
        $region52: #{tpu_custom_call.1} parent=47 // pred_fallthru
          _
      $region48: #{tpu_custom_call.1} parent=5 // pred_fallthru
        _
      %p411 = scmp.le.s32.totalorder 2, %s16
      // Predicated region
      $region53: #{tpu_custom_call.1} parent=5 // pred_check
        %p412 = pneg %p411
      $region54: #{tpu_custom_call.1} parent=5 // pred_check_branch
        %414 = sbr.rel (%p412) target = $region56
      $region55: #{tpu_custom_call.1} parent=5 // pred_region
        %s415 = ssub.s32 %s16, 2
        // Predicated region
        $region57: #{tpu_custom_call.1} parent=55 // pred_check
          %p416 = pneg %p197
        $region58: #{tpu_custom_call.1} parent=55 // pred_check_branch
          %418 = sbr.rel (%p416) target = $region60
        $region59: #{tpu_custom_call.1} parent=55 // pred_region
          %s419 = sand.u32 %s182, 1
          %s420 = scalar_lea.sflag [#allocation3], %s419
          %s421 = sand.u32 %s182, 1
          %s422 = smul.addr %s421, 16
          %s423 = scalar_lea.vmem [#allocation2], %s422
          %425 = dma.done %s420, 256
        $region60: #{tpu_custom_call.1} parent=55 // pred_fallthru
          _
      $region56: #{tpu_custom_call.1} parent=5 // pred_fallthru
        _
    $region6: #{tpu_custom_call.1} parent=1 // loop_footer
      %s20 = sadd.s32 1, %s16
    $region7: #{tpu_custom_call.1} parent=1 // loop_footer_branch
      %15 = sbr.rel target = $region3
    $region8: #{tpu_custom_call.1} parent=1 // loop_exit
      _
    %426 = vsyncpa [#allocation3], 1
    %s427 = scalar_lea.sflag [#allocation3], 1
    %428 = vsyncpa %s427, 1

</llo_original>
